<compile_context>
chip_gen: v7x
topology: tpu7x:2x2x1
jax: 0.10.0
libtpu: 0.0.40
codegen_flags: <defaults>
</compile_context>

<pallas_src>
import math
import functools

import jax
import jax.numpy as jnp
from jax.experimental import pallas as pl
from jax.experimental.pallas import tpu as pltpu

_EPS = 1e-5                       # nn.BatchNorm2d default eps

# Derive VMEM budget per generation (64 MiB physical on v7x, 128 MiB on v5e/v6e).
try:
    _VMEM_CAP = int(pltpu.get_tpu_info().vmem_capacity_bytes)
except Exception:                 # pragma: no cover - conservative fallback
    _VMEM_CAP = 64 * 1024 * 1024
_VMEM_LIMIT = min((_VMEM_CAP * 3) // 4, 96 * 1024 * 1024)


# ----------------------------------------------------------------------------- helpers

def _round_up(x, m):
    return (x + m - 1) // m * m


def _pick_m_tile(m):
    """Return (tm, m_pad): 16-aligned rows (bf16 sublane pack); single tile if <=512."""
    m_pad = _round_up(m, 16)
    if m_pad <= 512:
        return m_pad, m_pad
    tm = 512
    return tm, _round_up(m_pad, tm)


def _pick_row_tile(rows):
    """Row tile for the BN-apply kernel; >=2 parallel tiles when rows are large."""
    if rows > 256 and rows % 256 == 0:
        return 256
    return rows


# ----------------------------------------------------------------------------- kernels

def _matmul_stats_kernel(a_ref, b_ref, o_ref, s_ref, q_ref):
    """Single-K-tile matmul with the BN sum/sumsq reduction fused into the epilogue.

    a: (tm, K) bf16, b: (K, tn) bf16, o: (tm, tn) bf16,
    s/q: (1, tn) f32 resident accumulators across the (arbitrary) M grid axis.
    """
    @pl.when(pl.program_id(1) == 0)
    def _():
        s_ref[...] = jnp.zeros_like(s_ref)
        q_ref[...] = jnp.zeros_like(q_ref)

    acc = jnp.dot(a_ref[...], b_ref[...], preferred_element_type=jnp.float32)
    o_ref[...] = acc.astype(o_ref.dtype)
    s_ref[...] += jnp.sum(acc, axis=0, keepdims=True)
    q_ref[...] += jnp.sum(acc * acc, axis=0, keepdims=True)


def _affine_kernel(y_ref, s_ref, b_ref, o_ref, *, relu):
    """y * scale + bias (+ReLU) — BN apply with precomputed scale/bias (bf16 out)."""
    y = y_ref[...].astype(jnp.float32) * s_ref[...] + b_ref[...]
    if relu:
        y = jnp.maximum(y, 0.0)
    o_ref[...] = y.astype(o_ref.dtype)


def _affine_add_relu_kernel(y_ref, s_ref, b_ref, r_ref, o_ref):
    """BN apply fused with the residual add and ReLU (end of BasicBlock), bf16 out."""
    y = (y_ref[...].astype(jnp.float32) * s_ref[...] + b_ref[...]
         + r_ref[...].astype(jnp.float32))
    o_ref[...] = jnp.maximum(y, 0.0).astype(o_ref.dtype)


# ----------------------------------------------------------------------------- wrappers

def matmul_stats_pallas(a_bf16, w_bf16, *, tm):
    """(M,K)bf16 @ (K,N)bf16 -> ((M,N)bf16, (1,N)f32 sum, (1,N)f32 sumsq).

    Grid = (N tiles [parallel], M tiles [arbitrary]); K is a single tile so the
    whole weight block stays VMEM-resident across M tiles and there is no
    accumulator phase.  Stats come from the exact f32 accumulator.
    """
    m, kdim = a_bf16.shape
    k2, n = w_bf16.shape
    assert kdim == k2 and m % tm == 0
    # Two lane-dense output tiles for cout >= 256 so v7x's second TC gets work.
    tn = n if n <= 128 else n // 2
    gn, gm = n // tn, m // tm
    return pl.pallas_call(
        _matmul_stats_kernel,
        out_shape=(jax.ShapeDtypeStruct((m, n), jnp.bfloat16),
                   jax.ShapeDtypeStruct((1, n), jnp.float32),
                   jax.ShapeDtypeStruct((1, n), jnp.float32)),
        grid_spec=pltpu.PrefetchScalarGridSpec(
            num_scalar_prefetch=0,
            grid=(gn, gm),
            in_specs=[pl.BlockSpec((tm, kdim), lambda j, i: (i, 0)),
                      pl.BlockSpec((kdim, tn), lambda j, i: (0, j))],
            out_specs=(pl.BlockSpec((tm, tn), lambda j, i: (i, j)),
                       pl.BlockSpec((1, tn), lambda j, i: (0, j)),
                       pl.BlockSpec((1, tn), lambda j, i: (0, j)))),
        compiler_params=pltpu.CompilerParams(
            dimension_semantics=("parallel", "arbitrary"),
            vmem_limit_bytes=_VMEM_LIMIT),
    )(a_bf16, w_bf16)


def affine_pallas(y2, scale, bias, residual2=None, *, relu):
    """Tiled BN apply: y*scale + bias (+residual) (+ReLU), parallel row tiles, bf16."""
    rows, c = y2.shape
    tr = _pick_row_tile(rows)
    row_spec = pl.BlockSpec((tr, c), lambda i: (i, 0))
    vec_spec = pl.BlockSpec((1, c), lambda i: (0, 0))
    if residual2 is None:
        kernel = functools.partial(_affine_kernel, relu=relu)
        in_specs = [row_spec, vec_spec, vec_spec]
        args = (y2, scale, bias)
    else:
        assert relu  # BasicBlock always applies ReLU after the residual add
        kernel = _affine_add_relu_kernel
        in_specs = [row_spec, vec_spec, vec_spec, row_spec]
        args = (y2, scale, bias, residual2)
    return pl.pallas_call(
        kernel,
        out_shape=jax.ShapeDtypeStruct((rows, c), jnp.bfloat16),
        grid_spec=pltpu.PrefetchScalarGridSpec(
            num_scalar_prefetch=0,
            grid=(rows // tr,),
            in_specs=in_specs,
            out_specs=row_spec),
        compiler_params=pltpu.CompilerParams(
            dimension_semantics=("parallel",),
            vmem_limit_bytes=_VMEM_LIMIT),
    )(*args)


def conv_bn(x_nhwc, conv, gamma, beta, *, relu, residual=None):
    """conv (no bias) -> train-mode BatchNorm -> [+residual] -> [ReLU]; bf16 output."""
    x_nhwc = x_nhwc.astype(jnp.bfloat16)
    n, h, w, cin = x_nhwc.shape
    k, s, p, cout = conv['k'], conv['stride'], conv['pad'], conv['cout']
    assert cin == conv['cin']
    oh = (h + 2 * p - k) // s + 1
    ow = (w + 2 * p - k) // s + 1
    m = n * oh * ow
    kdim = k * k * cin

    # ---- im2col (XLA glue, bf16, no K padding).
    # TODO(synk): implicit GEMM for the 3x3 stride-1 convs to kill the 9x patch pass.
    if k == 1 and p == 0:
        patches = x_nhwc[:, ::s, ::s, :].reshape(m, cin)
    else:
        xp = jnp.pad(x_nhwc, ((0, 0), (p, p), (p, p), (0, 0)))
        cols = [xp[:, i:i + (oh - 1) * s + 1:s, j:j + (ow - 1) * s + 1:s, :]
                for i in range(k) for j in range(k)]
        patches = jnp.concatenate(cols, axis=-1).reshape(m, kdim)

    tm, m_pad = _pick_m_tile(m)
    if m_pad != m:
        patches = jnp.pad(patches, ((0, m_pad - m), (0, 0)))

    # ---- conv as a single-K-tile MXU matmul with fused BN stats (f32 accumulator).
    y, s_sum, s_sq = matmul_stats_pallas(patches, conv['w2d'], tm=tm)

    # ---- tiny per-channel scale/bias math (XLA, (cout,)-sized vectors).
    mean = s_sum[0] / m
    var = jnp.maximum(s_sq[0] / m - mean * mean, 0.0)   # biased variance (train mode)
    scale = (gamma * jax.lax.rsqrt(var + _EPS)).reshape(1, cout).astype(jnp.float32)
    bias = (beta - mean * scale[0]).reshape(1, cout).astype(jnp.float32)

    res2 = None
    if residual is not None:
        res2 = residual.astype(jnp.bfloat16).reshape(m, cout)
        if m_pad != m:
            res2 = jnp.pad(res2, ((0, m_pad - m), (0, 0)))

    # ---- BN apply (+residual add) (+ReLU), bf16 out.
    out2 = affine_pallas(y, scale, bias, res2, relu=relu)
    return out2[:m].reshape(n, oh, ow, cout)


def maxpool_3x3_s2_p1(x_nhwc):
    # Trivially memory-bound: leave to XLA's fused reduce_window (per perf review).
    return jax.lax.reduce_window(
        x_nhwc, jnp.array(-jnp.inf, x_nhwc.dtype), jax.lax.max,
        window_dimensions=(1, 3, 3, 1),
        window_strides=(1, 2, 2, 1),
        padding=((0, 0), (1, 1), (1, 1), (0, 0)))


# ----------------------------------------------------------------------------- model

def _make_conv(key, cin, cout, k, stride, pad):
    # matches: m.weight.data.normal_(0, sqrt(2 / (kh*kw*out_channels)))
    fan = k * k * cout
    w = jax.random.normal(key, (cout, cin, k, k), jnp.float32) * math.sqrt(2.0 / fan)
    # pre-flatten to (K, cout) with K order (kh, kw, cin); pre-cast bf16; no K pad.
    kdim = k * k * cin
    w2d = jnp.transpose(w, (2, 3, 1, 0)).reshape(kdim, cout).astype(jnp.bfloat16)
    return {'w2d': w2d, 'k': k, 'stride': stride, 'pad': pad,
            'cin': cin, 'cout': cout}


def init_resnet_params(key, layers=(1, 1, 1, 1)):
    params = {}
    key, k0 = jax.random.split(key)
    params['conv1'] = _make_conv(k0, 3, 64, 7, 2, 3)
    params['bn1_g'] = jnp.ones((64,), jnp.float32)
    params['bn1_b'] = jnp.zeros((64,), jnp.float32)
    inplanes = 64
    plane_cfg = (64, 128, 256, 512)
    stride_cfg = (1, 2, 2, 2)
    for li, (planes, nblocks, stride0) in enumerate(
            zip(plane_cfg, layers, stride_cfg), start=1):
        blocks = []
        for bi in range(nblocks):
            stride = stride0 if bi == 0 else 1
            key, k1, k2, k3 = jax.random.split(key, 4)
            blk = {
                'conv1': _make_conv(k1, inplanes, planes, 3, stride, 1),
                'bn1_g': jnp.ones((planes,), jnp.float32),
                'bn1_b': jnp.zeros((planes,), jnp.float32),
                'conv2': _make_conv(k2, planes, planes, 3, 1, 1),
                'bn2_g': jnp.ones((planes,), jnp.float32),
                'bn2_b': jnp.zeros((planes,), jnp.float32),
            }
            if stride != 1 or inplanes != planes:
                blk['ds'] = _make_conv(k3, inplanes, planes, 1, stride, 0)
                blk['ds_g'] = jnp.ones((planes,), jnp.float32)
                blk['ds_b'] = jnp.zeros((planes,), jnp.float32)
            blocks.append(blk)
            inplanes = planes
        params[f'layer{li}'] = blocks
    return params


def basic_block_forward(x, p):
    out = conv_bn(x, p['conv1'], p['bn1_g'], p['bn1_b'], relu=True)
    if 'ds' in p:
        identity = conv_bn(x, p['ds'], p['ds_g'], p['ds_b'], relu=False)
    else:
        identity = x
    # conv2 -> BN -> +identity -> ReLU is fused into one apply kernel.
    return conv_bn(out, p['conv2'], p['bn2_g'], p['bn2_b'], relu=True,
                   residual=identity)


def resnet_forward(params, x_nchw, lstm_emb):
    # lstm_emb only matters on the CBN path (use_cbn=True); with plain BatchNorm2d
    # it is passed through untouched, as in the reference module.
    del lstm_emb
    x = jnp.transpose(x_nchw, (0, 2, 3, 1))                        # NCHW -> NHWC
    x = conv_bn(x, params['conv1'], params['bn1_g'], params['bn1_b'], relu=True)
    x = maxpool_3x3_s2_p1(x)
    for li in range(1, 5):
        for blk in params[f'layer{li}']:
            x = basic_block_forward(x, blk)
    return jnp.transpose(x, (0, 3, 1, 2)).astype(jnp.float32)      # NHWC -> NCHW


# ----------------------------------------------------------------------------- main

if __name__ == "__main__":
    key = jax.random.PRNGKey(0)
    kp, kx, kl = jax.random.split(key, 3)

    # small ResNet (BasicBlock, layers=[1,1,1,1]), lstm_size=8
    params = init_resnet_params(kp, layers=(1, 1, 1, 1))

    x = jax.random.normal(kx, (2, 3, 32, 32), jnp.float32)        # NCHW, like PyTorch
    lstm_emb = jax.random.normal(kl, (2, 8), jnp.float32)

    out = resnet_forward(params, x, lstm_emb)
    out = jax.block_until_ready(out)
    assert out.shape == (2, 512, 1, 1), out.shape
    assert bool(jnp.all(jnp.isfinite(out)))
    print("KERNEL_OK")
</pallas_src>

<mosaic_0001>
module attributes {stable_mosaic.version = 11 : i64} {
  func.func @_matmul_stats_kernel(%arg0: i32, %arg1: i32, %arg2: memref<512x147xbf16, #tpu.memory_space<vmem>>, %arg3: memref<147x64xbf16, #tpu.memory_space<vmem>>, %arg4: memref<512x64xbf16, #tpu.memory_space<vmem>>, %arg5: memref<1x64xf32, #tpu.memory_space<vmem>>, %arg6: memref<1x64xf32, #tpu.memory_space<vmem>>) attributes {dimension_semantics = [#tpu.dimension_semantics<parallel>, #tpu.dimension_semantics<arbitrary>], iteration_bounds = array<i64: 1, 1>, scalar_prefetch = 0 : i64, scratch_operands = 0 : i64, tpu.core_type = #tpu.core_type<tc>, window_params = [{transform_indices = @transform_0, window_bounds = array<i64: 512, 147>}, {transform_indices = @transform_1, window_bounds = array<i64: 147, 64>}, {transform_indices = @transform_2, window_bounds = array<i64: 512, 64>}, {transform_indices = @transform_3, window_bounds = array<i64: 1, 64>}, {transform_indices = @transform_4, window_bounds = array<i64: 1, 64>}]} {
    %c0_i32 = arith.constant 0 : i32
    %0 = arith.cmpi eq, %arg1, %c0_i32 : i32
    %1 = arith.extui %0 : i1 to i32
    %c0_i32_0 = arith.constant 0 : i32
    %2 = arith.cmpi ne, %1, %c0_i32_0 : i32
    scf.if %2 {
      %cst_16 = arith.constant 0.000000e+00 : f32
      %19 = vector.broadcast %cst_16 : f32 to vector<1x64xf32>
      %c0_17 = arith.constant 0 : index
      %c0_18 = arith.constant 0 : index
      %20 = vector.load %arg5[%c0_17, %c0_18] : memref<1x64xf32, #tpu.memory_space<vmem>>, vector<1x64xf32>
      tpu.vector_store %arg5[%c0_17, %c0_18], %19 {strides = array<i32>} : memref<1x64xf32, #tpu.memory_space<vmem>>, vector<1x64xf32>,
      %cst_19 = arith.constant 0.000000e+00 : f32
      %21 = vector.broadcast %cst_19 : f32 to vector<1x64xf32>
      %c0_20 = arith.constant 0 : index
      %c0_21 = arith.constant 0 : index
      %22 = vector.load %arg6[%c0_20, %c0_21] : memref<1x64xf32, #tpu.memory_space<vmem>>, vector<1x64xf32>
      tpu.vector_store %arg6[%c0_20, %c0_21], %21 {strides = array<i32>} : memref<1x64xf32, #tpu.memory_space<vmem>>, vector<1x64xf32>,
    } else {
    }
    %c0 = arith.constant 0 : index
    %c0_1 = arith.constant 0 : index
    %3 = vector.load %arg2[%c0, %c0_1] : memref<512x147xbf16, #tpu.memory_space<vmem>>, vector<512x147xbf16>
    %c0_2 = arith.constant 0 : index
    %c0_3 = arith.constant 0 : index
    %4 = vector.load %arg3[%c0_2, %c0_3] : memref<147x64xbf16, #tpu.memory_space<vmem>>, vector<147x64xbf16>
    %cst = arith.constant dense<0.000000e+00> : vector<512x64xf32>
    %5 = tpu.matmul %3, %4, %cst {dimension_numbers = #tpu.dot_dimension_numbers<[1], [0], [0], [1], [0, 0, 1, 1], [], []>} : vector<512x147xbf16>, vector<147x64xbf16>, vector<512x64xf32> -> vector<512x64xf32>
    %6 = arith.truncf %5 : vector<512x64xf32> to vector<512x64xbf16>
    %c0_4 = arith.constant 0 : index
    %c0_5 = arith.constant 0 : index
    %7 = vector.load %arg4[%c0_4, %c0_5] : memref<512x64xbf16, #tpu.memory_space<vmem>>, vector<512x64xbf16>
    tpu.vector_store %arg4[%c0_4, %c0_5], %6 {strides = array<i32>} : memref<512x64xbf16, #tpu.memory_space<vmem>>, vector<512x64xbf16>,
    %c0_6 = arith.constant 0 : index
    %c0_7 = arith.constant 0 : index
    %8 = vector.load %arg5[%c0_6, %c0_7] : memref<1x64xf32, #tpu.memory_space<vmem>>, vector<1x64xf32>
    %cst_8 = arith.constant dense<0.000000e+00> : vector<64xf32>
    %9 = vector.multi_reduction <add>, %5, %cst_8 [0] : vector<512x64xf32> to vector<64xf32>
    %10 = vector.shape_cast %9 : vector<64xf32> to vector<1x64xf32>
    %11 = arith.addf %8, %10 : vector<1x64xf32>
    %c0_9 = arith.constant 0 : index
    %c0_10 = arith.constant 0 : index
    %12 = vector.load %arg5[%c0_9, %c0_10] : memref<1x64xf32, #tpu.memory_space<vmem>>, vector<1x64xf32>
    tpu.vector_store %arg5[%c0_9, %c0_10], %11 {strides = array<i32>} : memref<1x64xf32, #tpu.memory_space<vmem>>, vector<1x64xf32>,
    %c0_11 = arith.constant 0 : index
    %c0_12 = arith.constant 0 : index
    %13 = vector.load %arg6[%c0_11, %c0_12] : memref<1x64xf32, #tpu.memory_space<vmem>>, vector<1x64xf32>
    %14 = arith.mulf %5, %5 : vector<512x64xf32>
    %cst_13 = arith.constant dense<0.000000e+00> : vector<64xf32>
    %15 = vector.multi_reduction <add>, %14, %cst_13 [0] : vector<512x64xf32> to vector<64xf32>
    %16 = vector.shape_cast %15 : vector<64xf32> to vector<1x64xf32>
    %17 = arith.addf %13, %16 : vector<1x64xf32>
    %c0_14 = arith.constant 0 : index
    %c0_15 = arith.constant 0 : index
    %18 = vector.load %arg6[%c0_14, %c0_15] : memref<1x64xf32, #tpu.memory_space<vmem>>, vector<1x64xf32>
    tpu.vector_store %arg6[%c0_14, %c0_15], %17 {strides = array<i32>} : memref<1x64xf32, #tpu.memory_space<vmem>>, vector<1x64xf32>,
    return
  }
  func.func @transform_0(%arg0: i32, %arg1: i32) -> (i32, i32) {
    %c0_i32 = arith.constant 0 : i32
    %c0_i32_0 = arith.constant 0 : i32
    return %arg1, %c0_i32 : i32, i32
  }
  func.func @transform_1(%arg0: i32, %arg1: i32) -> (i32, i32) {
    %c0_i32 = arith.constant 0 : i32
    %c0_i32_0 = arith.constant 0 : i32
    return %c0_i32, %arg0 : i32, i32
  }
  func.func @transform_2(%arg0: i32, %arg1: i32) -> (i32, i32) {
    %c0_i32 = arith.constant 0 : i32
    return %arg1, %arg0 : i32, i32
  }
  func.func @transform_3(%arg0: i32, %arg1: i32) -> (i32, i32) {
    %c0_i32 = arith.constant 0 : i32
    %c0_i32_0 = arith.constant 0 : i32
    return %c0_i32, %arg0 : i32, i32
  }
  func.func @transform_4(%arg0: i32, %arg1: i32) -> (i32, i32) {
    %c0_i32 = arith.constant 0 : i32
    %c0_i32_0 = arith.constant 0 : i32
    return %c0_i32, %arg0 : i32, i32
  }
}

</mosaic_0001>

<llo_original>
// kernel: tpu_custom_call.1
$region0: #{tpu_custom_call.1}
  #allocation0 [shape = 'u32[]', space=smem, size = 0x4, offset = 0x4, fixed_abs, tag = 'smem constant byte address 0x4 - core index']
  #allocation1 [shape = 'u32[144,128]{1,0:T(1,128)}', space=vmem, size = 0x12000, scoped, tag = 'internal scratch']
  %s0 = inlined_call_operand.vmem [shape: bf16[512,147], index: 0, kind: input, shape index: {}]
  %s1 = inlined_call_operand.vmem [shape: bf16[147,64], index: 1, kind: input, shape index: {}]
  %s2 = inlined_call_operand.vmem [shape: bf16[512,64], index: 2, kind: output, shape index: {0}]
  %s3 = inlined_call_operand.hbm [shape: f32[1,64], index: 3, kind: output, shape index: {1}]
  %s4 = inlined_call_operand.hbm [shape: f32[1,64], index: 4, kind: output, shape index: {2}]
  %5 = xla_tuple %s2, %s3, %s4
  %s6 = sld [smem:[#allocation0]]
  $region38: #{tpu_custom_call.1} parent=0
    _
  %s8 = ssub.s32 1, %s6
  %s9 = scalar_select 0, %s8, %s6
  $region1: #{tpu_custom_call.1} parent=0
    #allocation2 [shape = 'u8[512]{0}', space=vmem, size = 0x400, scoped, tag = 'output window, operand 1, single buffered']
    #allocation3 [shape = 's32[1]{0}', space=sflag, size = 0x4, scoped, tag = 'scoped memory for tpu_custom_call.1']
    #allocation4 [shape = 'u8[512]{0}', space=vmem, size = 0x400, scoped, tag = 'output window, operand 2, single buffered']
    #allocation5 [shape = 's32[1]{0}', space=sflag, size = 0x4, scoped, tag = 'scoped memory for tpu_custom_call.1']
    %10 = vsyncpa [#allocation3], 0
    %11 = vsyncpa [#allocation5], 0
    // Predicated region
    $region2: #{tpu_custom_call.1} parent=1 // pred_check
      _
    $region3: #{tpu_custom_call.1} parent=1 // pred_check_branch
      %13 = sbr.rel (0) target = $region5
    $region4: #{tpu_custom_call.1} parent=1 // pred_region
      _
    $region5: #{tpu_custom_call.1} parent=1 // pred_fallthru
      _
    // Predicated region
    $region6: #{tpu_custom_call.1} parent=1 // pred_check
      _
    $region7: #{tpu_custom_call.1} parent=1 // pred_check_branch
      %15 = sbr.rel (0) target = $region9
    $region8: #{tpu_custom_call.1} parent=1 // pred_region
      _
    $region9: #{tpu_custom_call.1} parent=1 // pred_fallthru
      _
    %p17 = scmp.eq.s32.totalorder 0, 0
    // Predicated region
    $region10: #{tpu_custom_call.1} parent=1 // pred_check
      %p18 = pneg %p17
    $region11: #{tpu_custom_call.1} parent=1 // pred_check_branch
      %20 = sbr.rel (%p18) target = $region13
    $region12: #{tpu_custom_call.1} parent=1 // pred_region
      %vm21 = vcmask 516096
      %22 = vst.msk [vmem:[#allocation2] sm:$0x1] %vm21, 0.0
      %23 = vst.msk [vmem:[#allocation4] sm:$0x1] %vm21, 0.0
    $region13: #{tpu_custom_call.1} parent=1 // pred_fallthru
      _
    %v24 = vld [vmem:[%s0] sm:$0xff]
    %v25 = vld [vmem:[%s0 + $0x8] sm:$0xff]
    %v26 = vld [vmem:[%s0 + $0x10] sm:$0xff]
    %v27 = vld [vmem:[%s0 + $0x18] sm:$0xff]
    %v28 = vld [vmem:[%s0 + $0x20] sm:$0xff]
    %v29 = vld [vmem:[%s0 + $0x28] sm:$0xff]
    %v30 = vld [vmem:[%s0 + $0x30] sm:$0xff]
    %v31 = vld [vmem:[%s0 + $0x38] sm:$0xff]
    %v32 = vld [vmem:[%s0 + $0x40] sm:$0xff]
    %v33 = vld [vmem:[%s0 + $0x48] sm:$0xff]
    %v34 = vld [vmem:[%s0 + $0x50] sm:$0xff]
    %v35 = vld [vmem:[%s0 + $0x58] sm:$0xff]
    %v36 = vld [vmem:[%s0 + $0x60] sm:$0xff]
    %v37 = vld [vmem:[%s0 + $0x68] sm:$0xff]
    %v38 = vld [vmem:[%s0 + $0x70] sm:$0xff]
    %v39 = vld [vmem:[%s0 + $0x78] sm:$0xff]
    %v40 = vld [vmem:[%s0 + $0x80] sm:$0xff]
    %v41 = vld [vmem:[%s0 + $0x88] sm:$0xff]
    %v42 = vld [vmem:[%s0 + $0x90] sm:$0xff]
    %v43 = vld [vmem:[%s0 + $0x98] sm:$0xff]
    %v44 = vld [vmem:[%s0 + $0xa0] sm:$0xff]
    %v45 = vld [vmem:[%s0 + $0xa8] sm:$0xff]
    %v46 = vld [vmem:[%s0 + $0xb0] sm:$0xff]
    %v47 = vld [vmem:[%s0 + $0xb8] sm:$0xff]
    %v48 = vld [vmem:[%s0 + $0xc0] sm:$0xff]
    %v49 = vld [vmem:[%s0 + $0xc8] sm:$0xff]
    %v50 = vld [vmem:[%s0 + $0xd0] sm:$0xff]
    %v51 = vld [vmem:[%s0 + $0xd8] sm:$0xff]
    %v52 = vld [vmem:[%s0 + $0xe0] sm:$0xff]
    %v53 = vld [vmem:[%s0 + $0xe8] sm:$0xff]
    %v54 = vld [vmem:[%s0 + $0xf0] sm:$0xff]
    %v55 = vld [vmem:[%s0 + $0xf8] sm:$0xff]
    %v56 = vld [vmem:[%s0 + $0x100] sm:$0xff]
    %v57 = vld [vmem:[%s0 + $0x108] sm:$0xff]
    %v58 = vld [vmem:[%s0 + $0x110] sm:$0xff]
    %v59 = vld [vmem:[%s0 + $0x118] sm:$0xff]
    %v60 = vld [vmem:[%s0 + $0x120] sm:$0xff]
    %v61 = vld [vmem:[%s0 + $0x128] sm:$0xff]
    %v62 = vld [vmem:[%s0 + $0x130] sm:$0xff]
    %v63 = vld [vmem:[%s0 + $0x138] sm:$0xff]
    %v64 = vld [vmem:[%s0 + $0x140] sm:$0xff]
    %v65 = vld [vmem:[%s0 + $0x148] sm:$0xff]
    %v66 = vld [vmem:[%s0 + $0x150] sm:$0xff]
    %v67 = vld [vmem:[%s0 + $0x158] sm:$0xff]
    %v68 = vld [vmem:[%s0 + $0x160] sm:$0xff]
    %v69 = vld [vmem:[%s0 + $0x168] sm:$0xff]
    %v70 = vld [vmem:[%s0 + $0x170] sm:$0xff]
    %v71 = vld [vmem:[%s0 + $0x178] sm:$0xff]
    %v72 = vld [vmem:[%s0 + $0x180] sm:$0xff]
    %v73 = vld [vmem:[%s0 + $0x188] sm:$0xff]
    %v74 = vld [vmem:[%s0 + $0x190] sm:$0xff]
    %v75 = vld [vmem:[%s0 + $0x198] sm:$0xff]
    %v76 = vld [vmem:[%s0 + $0x1a0] sm:$0xff]
    %v77 = vld [vmem:[%s0 + $0x1a8] sm:$0xff]
    %v78 = vld [vmem:[%s0 + $0x1b0] sm:$0xff]
    %v79 = vld [vmem:[%s0 + $0x1b8] sm:$0xff]
    %v80 = vld [vmem:[%s0 + $0x1c0] sm:$0xff]
    %v81 = vld [vmem:[%s0 + $0x1c8] sm:$0xff]
    %v82 = vld [vmem:[%s0 + $0x1d0] sm:$0xff]
    %v83 = vld [vmem:[%s0 + $0x1d8] sm:$0xff]
    %v84 = vld [vmem:[%s0 + $0x1e0] sm:$0xff]
    %v85 = vld [vmem:[%s0 + $0x1e8] sm:$0xff]
    %v86 = vld [vmem:[%s0 + $0x1f0] sm:$0xff]
    %v87 = vld [vmem:[%s0 + $0x1f8] sm:$0xff]
    %v88 = vld [vmem:[%s1] sm:$0xf]
    %v89 = vld [vmem:[%s1 + $0x4] sm:$0xf]
    %v90 = vld [vmem:[%s1 + $0x8] sm:$0xf]
    %v91 = vld [vmem:[%s1 + $0xc] sm:$0xf]
    %v92 = vld [vmem:[%s1 + $0x10] sm:$0xf]
    %v93 = vld [vmem:[%s1 + $0x14] sm:$0xf]
    %v94 = vld [vmem:[%s1 + $0x18] sm:$0xf]
    %v95 = vld [vmem:[%s1 + $0x1c] sm:$0xf]
    %v96 = vld [vmem:[%s1 + $0x20] sm:$0xf]
    %v97 = vld [vmem:[%s1 + $0x24] sm:$0xf]
    %v98 = vld [vmem:[%s1 + $0x28] sm:$0xf]
    %v99 = vld [vmem:[%s1 + $0x2c] sm:$0xf]
    %v100 = vld [vmem:[%s1 + $0x30] sm:$0xf]
    %v101 = vld [vmem:[%s1 + $0x34] sm:$0xf]
    %v102 = vld [vmem:[%s1 + $0x38] sm:$0xf]
    %v103 = vld [vmem:[%s1 + $0x3c] sm:$0xf]
    %v104 = vld [vmem:[%s1 + $0x40] sm:$0xf]
    %v105 = vld [vmem:[%s1 + $0x44] sm:$0xf]
    %v106 = vld [vmem:[%s1 + $0x48] sm:$0x3]
    %v171 = vunpack.c.l.b16 %v24
    %v172 = vunpack.c.h.b16 %v24
    %v173 = vunpack.c.l.b16 %v25
    %v174 = vunpack.c.h.b16 %v25
    %v175 = vunpack.c.l.b16 %v26
    %v176 = vunpack.c.h.b16 %v26
    %v177 = vunpack.c.l.b16 %v27
    %v178 = vunpack.c.h.b16 %v27
    %v179 = vunpack.c.l.b16 %v28
    %v180 = vunpack.c.h.b16 %v28
    %v181 = vunpack.c.l.b16 %v29
    %v182 = vunpack.c.h.b16 %v29
    %v183 = vunpack.c.l.b16 %v30
    %v184 = vunpack.c.h.b16 %v30
    %v185 = vunpack.c.l.b16 %v31
    %v186 = vunpack.c.h.b16 %v31
    %v187 = vunpack.c.l.b16 %v32
    %v188 = vunpack.c.h.b16 %v32
    %v189 = vunpack.c.l.b16 %v33
    %v190 = vunpack.c.h.b16 %v33
    %v191 = vunpack.c.l.b16 %v34
    %v192 = vunpack.c.h.b16 %v34
    %v193 = vunpack.c.l.b16 %v35
    %v194 = vunpack.c.h.b16 %v35
    %v195 = vunpack.c.l.b16 %v36
    %v196 = vunpack.c.h.b16 %v36
    %v197 = vunpack.c.l.b16 %v37
    %v198 = vunpack.c.h.b16 %v37
    %v199 = vunpack.c.l.b16 %v38
    %v200 = vunpack.c.h.b16 %v38
    %v201 = vunpack.c.l.b16 %v39
    %v202 = vunpack.c.h.b16 %v39
    %v203 = vunpack.c.l.b16 %v40
    %v204 = vunpack.c.h.b16 %v40
    %v205 = vunpack.c.l.b16 %v41
    %v206 = vunpack.c.h.b16 %v41
    %v207 = vunpack.c.l.b16 %v42
    %v208 = vunpack.c.h.b16 %v42
    %v209 = vunpack.c.l.b16 %v43
    %v210 = vunpack.c.h.b16 %v43
    %v211 = vunpack.c.l.b16 %v44
    %v212 = vunpack.c.h.b16 %v44
    %v213 = vunpack.c.l.b16 %v45
    %v214 = vunpack.c.h.b16 %v45
    %v215 = vunpack.c.l.b16 %v46
    %v216 = vunpack.c.h.b16 %v46
    %v217 = vunpack.c.l.b16 %v47
    %v218 = vunpack.c.h.b16 %v47
    %v219 = vunpack.c.l.b16 %v48
    %v220 = vunpack.c.h.b16 %v48
    %v221 = vunpack.c.l.b16 %v49
    %v222 = vunpack.c.h.b16 %v49
    %v223 = vunpack.c.l.b16 %v50
    %v224 = vunpack.c.h.b16 %v50
    %v225 = vunpack.c.l.b16 %v51
    %v226 = vunpack.c.h.b16 %v51
    %v227 = vunpack.c.l.b16 %v52
    %v228 = vunpack.c.h.b16 %v52
    %v229 = vunpack.c.l.b16 %v53
    %v230 = vunpack.c.h.b16 %v53
    %v231 = vunpack.c.l.b16 %v54
    %v232 = vunpack.c.h.b16 %v54
    %v233 = vunpack.c.l.b16 %v55
    %v234 = vunpack.c.h.b16 %v55
    %v235 = vunpack.c.l.b16 %v56
    %v236 = vunpack.c.h.b16 %v56
    %v237 = vunpack.c.l.b16 %v57
    %v238 = vunpack.c.h.b16 %v57
    %v239 = vunpack.c.l.b16 %v58
    %v240 = vunpack.c.h.b16 %v58
    %v241 = vunpack.c.l.b16 %v59
    %v242 = vunpack.c.h.b16 %v59
    %v243 = vunpack.c.l.b16 %v60
    %v244 = vunpack.c.h.b16 %v60
    %v245 = vunpack.c.l.b16 %v61
    %v246 = vunpack.c.h.b16 %v61
    %v247 = vunpack.c.l.b16 %v62
    %v248 = vunpack.c.h.b16 %v62
    %v249 = vunpack.c.l.b16 %v63
    %v250 = vunpack.c.h.b16 %v63
    %v251 = vunpack.c.l.b16 %v64
    %v252 = vunpack.c.h.b16 %v64
    %v253 = vunpack.c.l.b16 %v65
    %v254 = vunpack.c.h.b16 %v65
    %v255 = vunpack.c.l.b16 %v66
    %v256 = vunpack.c.h.b16 %v66
    %v257 = vunpack.c.l.b16 %v67
    %v258 = vunpack.c.h.b16 %v67
    %v259 = vunpack.c.l.b16 %v68
    %v260 = vunpack.c.h.b16 %v68
    %v261 = vunpack.c.l.b16 %v69
    %v262 = vunpack.c.h.b16 %v69
    %v263 = vunpack.c.l.b16 %v70
    %v264 = vunpack.c.h.b16 %v70
    %v265 = vunpack.c.l.b16 %v71
    %v266 = vunpack.c.h.b16 %v71
    %v267 = vunpack.c.l.b16 %v72
    %v268 = vunpack.c.h.b16 %v72
    %v269 = vunpack.c.l.b16 %v73
    %v270 = vunpack.c.h.b16 %v73
    %v271 = vunpack.c.l.b16 %v74
    %v272 = vunpack.c.h.b16 %v74
    %v273 = vunpack.c.l.b16 %v75
    %v274 = vunpack.c.h.b16 %v75
    %v275 = vunpack.c.l.b16 %v76
    %v276 = vunpack.c.h.b16 %v76
    %v277 = vunpack.c.l.b16 %v77
    %v278 = vunpack.c.h.b16 %v77
    %v279 = vunpack.c.l.b16 %v78
    %v280 = vunpack.c.h.b16 %v78
    %v281 = vunpack.c.l.b16 %v79
    %v282 = vunpack.c.h.b16 %v79
    %v283 = vunpack.c.l.b16 %v80
    %v284 = vunpack.c.h.b16 %v80
    %v285 = vunpack.c.l.b16 %v81
    %v286 = vunpack.c.h.b16 %v81
    %v287 = vunpack.c.l.b16 %v82
    %v288 = vunpack.c.h.b16 %v82
    %v289 = vunpack.c.l.b16 %v83
    %v290 = vunpack.c.h.b16 %v83
    %v291 = vunpack.c.l.b16 %v84
    %v292 = vunpack.c.h.b16 %v84
    %v293 = vunpack.c.l.b16 %v85
    %v294 = vunpack.c.h.b16 %v85
    %v295 = vunpack.c.l.b16 %v86
    %v296 = vunpack.c.h.b16 %v86
    %v297 = vunpack.c.l.b16 %v87
    %v298 = vunpack.c.h.b16 %v87
    %v299 = vpack.c.b16 %v173, %v171
    %v300 = vpack.c.b16 %v174, %v172
    %v301 = vpack.c.b16 %v177, %v175
    %v302 = vpack.c.b16 %v178, %v176
    %v303 = vpack.c.b16 %v181, %v179
    %v304 = vpack.c.b16 %v182, %v180
    %v305 = vpack.c.b16 %v185, %v183
    %v306 = vpack.c.b16 %v186, %v184
    %v307 = vpack.c.b16 %v189, %v187
    %v308 = vpack.c.b16 %v190, %v188
    %v309 = vpack.c.b16 %v193, %v191
    %v310 = vpack.c.b16 %v194, %v192
    %v311 = vpack.c.b16 %v197, %v195
    %v312 = vpack.c.b16 %v198, %v196
    %v313 = vpack.c.b16 %v201, %v199
    %v314 = vpack.c.b16 %v202, %v200
    %v315 = vpack.c.b16 %v205, %v203
    %v316 = vpack.c.b16 %v206, %v204
    %v317 = vpack.c.b16 %v209, %v207
    %v318 = vpack.c.b16 %v210, %v208
    %v319 = vpack.c.b16 %v213, %v211
    %v320 = vpack.c.b16 %v214, %v212
    %v321 = vpack.c.b16 %v217, %v215
    %v322 = vpack.c.b16 %v218, %v216
    %v323 = vpack.c.b16 %v221, %v219
    %v324 = vpack.c.b16 %v222, %v220
    %v325 = vpack.c.b16 %v225, %v223
    %v326 = vpack.c.b16 %v226, %v224
    %v327 = vpack.c.b16 %v229, %v227
    %v328 = vpack.c.b16 %v230, %v228
    %v329 = vpack.c.b16 %v233, %v231
    %v330 = vpack.c.b16 %v234, %v232
    %v331 = vpack.c.b16 %v237, %v235
    %v332 = vpack.c.b16 %v238, %v236
    %v333 = vpack.c.b16 %v241, %v239
    %v334 = vpack.c.b16 %v242, %v240
    %v335 = vpack.c.b16 %v245, %v243
    %v336 = vpack.c.b16 %v246, %v244
    %v337 = vpack.c.b16 %v249, %v247
    %v338 = vpack.c.b16 %v250, %v248
    %v339 = vpack.c.b16 %v253, %v251
    %v340 = vpack.c.b16 %v254, %v252
    %v341 = vpack.c.b16 %v257, %v255
    %v342 = vpack.c.b16 %v258, %v256
    %v343 = vpack.c.b16 %v261, %v259
    %v344 = vpack.c.b16 %v262, %v260
    %v345 = vpack.c.b16 %v265, %v263
    %v346 = vpack.c.b16 %v266, %v264
    %v347 = vpack.c.b16 %v269, %v267
    %v348 = vpack.c.b16 %v270, %v268
    %v349 = vpack.c.b16 %v273, %v271
    %v350 = vpack.c.b16 %v274, %v272
    %v351 = vpack.c.b16 %v277, %v275
    %v352 = vpack.c.b16 %v278, %v276
    %v353 = vpack.c.b16 %v281, %v279
    %v354 = vpack.c.b16 %v282, %v280
    %v355 = vpack.c.b16 %v285, %v283
    %v356 = vpack.c.b16 %v286, %v284
    %v357 = vpack.c.b16 %v289, %v287
    %v358 = vpack.c.b16 %v290, %v288
    %v359 = vpack.c.b16 %v293, %v291
    %v360 = vpack.c.b16 %v294, %v292
    %v361 = vpack.c.b16 %v297, %v295
    %v362 = vpack.c.b16 %v298, %v296
    %v414 = vunpack.c.l.b16 %v88
    %v415 = vunpack.c.l.b16 %v89
    %v416 = vunpack.c.l.b16 %v90
    %v417 = vunpack.c.l.b16 %v91
    %v418 = vunpack.c.l.b16 %v92
    %v419 = vunpack.c.l.b16 %v93
    %v420 = vunpack.c.l.b16 %v94
    %v421 = vunpack.c.l.b16 %v95
    %v422 = vunpack.c.l.b16 %v96
    %v423 = vunpack.c.l.b16 %v97
    %v424 = vunpack.c.l.b16 %v98
    %v425 = vunpack.c.l.b16 %v99
    %v426 = vunpack.c.l.b16 %v100
    %v427 = vunpack.c.l.b16 %v101
    %v428 = vunpack.c.l.b16 %v102
    %v429 = vunpack.c.l.b16 %v103
    %v430 = vunpack.c.l.b16 %v104
    %v431 = vunpack.c.l.b16 %v105
    %v432 = vunpack.c.l.b16 %v106
    %v433 = vpack.c.b16 %v415, %v414
    %v434 = vpack.c.b16 %v417, %v416
    %v435 = vpack.c.b16 %v419, %v418
    %v436 = vpack.c.b16 %v421, %v420
    %v437 = vpack.c.b16 %v423, %v422
    %v438 = vpack.c.b16 %v425, %v424
    %v439 = vpack.c.b16 %v427, %v426
    %v440 = vpack.c.b16 %v429, %v428
    %v441 = vpack.c.b16 %v431, %v430
    %v442 = vpack.c.b16 %v432, %v432
    %vm452 = vcmask 154624
    %v454 = vsel %vm452, %v300, 0
    %v457 = vsel %vm452, %v302, 0
    %v460 = vsel %vm452, %v304, 0
    %v463 = vsel %vm452, %v306, 0
    %v466 = vsel %vm452, %v308, 0
    %v469 = vsel %vm452, %v310, 0
    %v472 = vsel %vm452, %v312, 0
    %v475 = vsel %vm452, %v314, 0
    %v478 = vsel %vm452, %v316, 0
    %v481 = vsel %vm452, %v318, 0
    %v484 = vsel %vm452, %v320, 0
    %v487 = vsel %vm452, %v322, 0
    %v490 = vsel %vm452, %v324, 0
    %v493 = vsel %vm452, %v326, 0
    %v496 = vsel %vm452, %v328, 0
    %v499 = vsel %vm452, %v330, 0
    %v502 = vsel %vm452, %v332, 0
    %v505 = vsel %vm452, %v334, 0
    %v508 = vsel %vm452, %v336, 0
    %v511 = vsel %vm452, %v338, 0
    %v514 = vsel %vm452, %v340, 0
    %v517 = vsel %vm452, %v342, 0
    %v520 = vsel %vm452, %v344, 0
    %v523 = vsel %vm452, %v346, 0
    %v526 = vsel %vm452, %v348, 0
    %v529 = vsel %vm452, %v350, 0
    %v532 = vsel %vm452, %v352, 0
    %v535 = vsel %vm452, %v354, 0
    %v538 = vsel %vm452, %v356, 0
    %v541 = vsel %vm452, %v358, 0
    %v544 = vsel %vm452, %v360, 0
    %v547 = vsel %vm452, %v362, 0
    %vm549 = vcmask 1040384
    %vm550 = vcmask 1041408
    %v551 = vsel %vm549, 4294967295, 65535
    %v552 = vsel %vm550, %v551, 0
    %v554 = vand.u32 %v442, %v552
    %556 = vmatprep.subr.bf16.mxu0 0
    %557 = vmatpush1.bf16.msra.mxu0 %v433
    %558 = vmatprep.subr.bf16.mxu0 0
    %559 = vmatpush1.bf16.msra.mxu0 %v434
    %560 = vmatprep.subr.bf16.mxu0 0
    %561 = vmatpush1.bf16.msra.mxu0 %v435
    %562 = vmatprep.subr.bf16.mxu0 0
    %563 = vmatpush1.bf16.msra.mxu0 %v436
    %564 = vmatprep.subr.bf16.mxu0 0
    %565 = vmatpush1.bf16.msra.mxu0 %v437
    %566 = vmatprep.subr.bf16.mxu0 0
    %567 = vmatpush1.bf16.msra.mxu0 %v438
    %568 = vmatprep.subr.bf16.mxu0 0
    %569 = vmatpush1.bf16.msra.mxu0 %v439
    %570 = vmatprep.subr.bf16.mxu0 0
    %571 = vmatpush1.bf16.msra.mxu0 %v440
    %572 = vmatprep.subr.bf16.mxu0 0
    %573 = vmatpush1.bf16.msra.mxu0 %v441
    %574 = vmatprep.subr.bf16.mxu0 0
    %575 = vmatpush1.bf16.msra.mxu0 %v554
    %576 = vmatprep.subr.bf16.mxu0 0
    %577 = vmatpush1.bf16.msra.mxu0 0
    %578 = vmatprep.subr.bf16.mxu0 0
    %579 = vmatpush1.bf16.msra.mxu0 0
    %580 = vmatprep.subr.bf16.mxu0 0
    %581 = vmatpush1.bf16.msra.mxu0 0
    %582 = vmatprep.subr.bf16.mxu0 0
    %583 = vmatpush1.bf16.msra.mxu0 0
    %584 = vmatprep.subr.bf16.mxu0 0
    %585 = vmatpush1.bf16.msra.mxu0 0
    %586 = vmatprep.subr.bf16.mxu0 0
    %587 = vmatpush1.bf16.msra.mxu0 0
    %588 = vmatprep.mubr.bf16.mxu0 %v454
    %589 = vmatmul.mubr.bf16.gmra.mrb[0].mxu0 %v299
    %v590 = vpop.f32.mrb[0].mxu0
    %v591 = vadd.f32 0.0, %v590
    %v592 = vpop.f32.mrb[0].mxu0
    %v593 = vpop.f32.mrb[0].mxu0
    %v594 = vadd.f32 0.0, %v593
    %v595 = vpop.f32.mrb[0].mxu0
    %596 = vmatprep.mubr.bf16.mxu0 %v457
    %597 = vmatmul.mubr.bf16.gmra.mrb[0].mxu0 %v301
    %v598 = vpop.f32.mrb[0].mxu0
    %v599 = vadd.f32 0.0, %v598
    %v600 = vpop.f32.mrb[0].mxu0
    %v601 = vpop.f32.mrb[0].mxu0
    %v602 = vadd.f32 0.0, %v601
    %v603 = vpop.f32.mrb[0].mxu0
    %604 = vmatprep.mubr.bf16.mxu0 %v460
    %605 = vmatmul.mubr.bf16.gmra.mrb[0].mxu0 %v303
    %v606 = vpop.f32.mrb[0].mxu0
    %v607 = vadd.f32 0.0, %v606
    %v608 = vpop.f32.mrb[0].mxu0
    %v609 = vpop.f32.mrb[0].mxu0
    %v610 = vadd.f32 0.0, %v609
    %v611 = vpop.f32.mrb[0].mxu0
    %612 = vmatprep.mubr.bf16.mxu0 %v463
    %613 = vmatmul.mubr.bf16.gmra.mrb[0].mxu0 %v305
    %v614 = vpop.f32.mrb[0].mxu0
    %v615 = vadd.f32 0.0, %v614
    %v616 = vpop.f32.mrb[0].mxu0
    %v617 = vpop.f32.mrb[0].mxu0
    %v618 = vadd.f32 0.0, %v617
    %v619 = vpop.f32.mrb[0].mxu0
    %620 = vmatprep.mubr.bf16.mxu0 %v466
    %621 = vmatmul.mubr.bf16.gmra.mrb[0].mxu0 %v307
    %v622 = vpop.f32.mrb[0].mxu0
    %v623 = vadd.f32 0.0, %v622
    %v624 = vpop.f32.mrb[0].mxu0
    %v625 = vpop.f32.mrb[0].mxu0
    %v626 = vadd.f32 0.0, %v625
    %v627 = vpop.f32.mrb[0].mxu0
    %628 = vmatprep.mubr.bf16.mxu0 %v469
    %629 = vmatmul.mubr.bf16.gmra.mrb[0].mxu0 %v309
    %v630 = vpop.f32.mrb[0].mxu0
    %v631 = vadd.f32 0.0, %v630
    %v632 = vpop.f32.mrb[0].mxu0
    %v633 = vpop.f32.mrb[0].mxu0
    %v634 = vadd.f32 0.0, %v633
    %v635 = vpop.f32.mrb[0].mxu0
    %636 = vmatprep.mubr.bf16.mxu0 %v472
    %637 = vmatmul.mubr.bf16.gmra.mrb[0].mxu0 %v311
    %v638 = vpop.f32.mrb[0].mxu0
    %v639 = vadd.f32 0.0, %v638
    %v640 = vpop.f32.mrb[0].mxu0
    %v641 = vpop.f32.mrb[0].mxu0
    %v642 = vadd.f32 0.0, %v641
    %v643 = vpop.f32.mrb[0].mxu0
    %644 = vmatprep.mubr.bf16.mxu0 %v475
    %645 = vmatmul.mubr.bf16.gmra.mrb[0].mxu0 %v313
    %v646 = vpop.f32.mrb[0].mxu0
    %v647 = vadd.f32 0.0, %v646
    %v648 = vpop.f32.mrb[0].mxu0
    %v649 = vpop.f32.mrb[0].mxu0
    %v650 = vadd.f32 0.0, %v649
    %v651 = vpop.f32.mrb[0].mxu0
    %652 = vmatprep.mubr.bf16.mxu0 %v478
    %653 = vmatmul.mubr.bf16.gmra.mrb[0].mxu0 %v315
    %v654 = vpop.f32.mrb[0].mxu0
    %v655 = vadd.f32 0.0, %v654
    %v656 = vpop.f32.mrb[0].mxu0
    %v657 = vpop.f32.mrb[0].mxu0
    %v658 = vadd.f32 0.0, %v657
    %v659 = vpop.f32.mrb[0].mxu0
    %660 = vmatprep.mubr.bf16.mxu0 %v481
    %661 = vmatmul.mubr.bf16.gmra.mrb[0].mxu0 %v317
    %v662 = vpop.f32.mrb[0].mxu0
    %v663 = vadd.f32 0.0, %v662
    %v664 = vpop.f32.mrb[0].mxu0
    %v665 = vpop.f32.mrb[0].mxu0
    %v666 = vadd.f32 0.0, %v665
    %v667 = vpop.f32.mrb[0].mxu0
    %668 = vmatprep.mubr.bf16.mxu0 %v484
    %669 = vmatmul.mubr.bf16.gmra.mrb[0].mxu0 %v319
    %v670 = vpop.f32.mrb[0].mxu0
    %v671 = vadd.f32 0.0, %v670
    %v672 = vpop.f32.mrb[0].mxu0
    %v673 = vpop.f32.mrb[0].mxu0
    %v674 = vadd.f32 0.0, %v673
    %v675 = vpop.f32.mrb[0].mxu0
    %676 = vmatprep.mubr.bf16.mxu0 %v487
    %677 = vmatmul.mubr.bf16.gmra.mrb[0].mxu0 %v321
    %v678 = vpop.f32.mrb[0].mxu0
    %v679 = vadd.f32 0.0, %v678
    %v680 = vpop.f32.mrb[0].mxu0
    %v681 = vpop.f32.mrb[0].mxu0
    %v682 = vadd.f32 0.0, %v681
    %v683 = vpop.f32.mrb[0].mxu0
    %684 = vmatprep.mubr.bf16.mxu0 %v490
    %685 = vmatmul.mubr.bf16.gmra.mrb[0].mxu0 %v323
    %v686 = vpop.f32.mrb[0].mxu0
    %v687 = vadd.f32 0.0, %v686
    %v688 = vpop.f32.mrb[0].mxu0
    %v689 = vpop.f32.mrb[0].mxu0
    %v690 = vadd.f32 0.0, %v689
    %v691 = vpop.f32.mrb[0].mxu0
    %692 = vmatprep.mubr.bf16.mxu0 %v493
    %693 = vmatmul.mubr.bf16.gmra.mrb[0].mxu0 %v325
    %v694 = vpop.f32.mrb[0].mxu0
    %v695 = vadd.f32 0.0, %v694
    %v696 = vpop.f32.mrb[0].mxu0
    %v697 = vpop.f32.mrb[0].mxu0
    %v698 = vadd.f32 0.0, %v697
    %v699 = vpop.f32.mrb[0].mxu0
    %700 = vmatprep.mubr.bf16.mxu0 %v496
    %701 = vmatmul.mubr.bf16.gmra.mrb[0].mxu0 %v327
    %v702 = vpop.f32.mrb[0].mxu0
    %v703 = vadd.f32 0.0, %v702
    %v704 = vpop.f32.mrb[0].mxu0
    %v705 = vpop.f32.mrb[0].mxu0
    %v706 = vadd.f32 0.0, %v705
    %v707 = vpop.f32.mrb[0].mxu0
    %708 = vmatprep.mubr.bf16.mxu0 %v499
    %709 = vmatmul.mubr.bf16.gmra.mrb[0].mxu0 %v329
    %v710 = vpop.f32.mrb[0].mxu0
    %v711 = vadd.f32 0.0, %v710
    %v712 = vpop.f32.mrb[0].mxu0
    %v713 = vpop.f32.mrb[0].mxu0
    %v714 = vadd.f32 0.0, %v713
    %v715 = vpop.f32.mrb[0].mxu0
    %716 = vmatprep.mubr.bf16.mxu0 %v502
    %717 = vmatmul.mubr.bf16.gmra.mrb[0].mxu0 %v331
    %v718 = vpop.f32.mrb[0].mxu0
    %v719 = vadd.f32 0.0, %v718
    %v720 = vpop.f32.mrb[0].mxu0
    %v721 = vpop.f32.mrb[0].mxu0
    %v722 = vadd.f32 0.0, %v721
    %v723 = vpop.f32.mrb[0].mxu0
    %724 = vmatprep.mubr.bf16.mxu0 %v505
    %725 = vmatmul.mubr.bf16.gmra.mrb[0].mxu0 %v333
    %v726 = vpop.f32.mrb[0].mxu0
    %v727 = vadd.f32 0.0, %v726
    %v728 = vpop.f32.mrb[0].mxu0
    %v729 = vpop.f32.mrb[0].mxu0
    %v730 = vadd.f32 0.0, %v729
    %v731 = vpop.f32.mrb[0].mxu0
    %732 = vmatprep.mubr.bf16.mxu0 %v508
    %733 = vmatmul.mubr.bf16.gmra.mrb[0].mxu0 %v335
    %v734 = vpop.f32.mrb[0].mxu0
    %v735 = vadd.f32 0.0, %v734
    %v736 = vpop.f32.mrb[0].mxu0
    %v737 = vpop.f32.mrb[0].mxu0
    %v738 = vadd.f32 0.0, %v737
    %v739 = vpop.f32.mrb[0].mxu0
    %740 = vmatprep.mubr.bf16.mxu0 %v511
    %741 = vmatmul.mubr.bf16.gmra.mrb[0].mxu0 %v337
    %v742 = vpop.f32.mrb[0].mxu0
    %v743 = vadd.f32 0.0, %v742
    %v744 = vpop.f32.mrb[0].mxu0
    %v745 = vpop.f32.mrb[0].mxu0
    %v746 = vadd.f32 0.0, %v745
    %v747 = vpop.f32.mrb[0].mxu0
    %748 = vmatprep.mubr.bf16.mxu0 %v514
    %749 = vmatmul.mubr.bf16.gmra.mrb[0].mxu0 %v339
    %v750 = vpop.f32.mrb[0].mxu0
    %v751 = vadd.f32 0.0, %v750
    %v752 = vpop.f32.mrb[0].mxu0
    %v753 = vpop.f32.mrb[0].mxu0
    %v754 = vadd.f32 0.0, %v753
    %v755 = vpop.f32.mrb[0].mxu0
    %756 = vmatprep.mubr.bf16.mxu0 %v517
    %757 = vmatmul.mubr.bf16.gmra.mrb[0].mxu0 %v341
    %v758 = vpop.f32.mrb[0].mxu0
    %v759 = vadd.f32 0.0, %v758
    %v760 = vpop.f32.mrb[0].mxu0
    %v761 = vpop.f32.mrb[0].mxu0
    %v762 = vadd.f32 0.0, %v761
    %v763 = vpop.f32.mrb[0].mxu0
    %764 = vmatprep.mubr.bf16.mxu0 %v520
    %765 = vmatmul.mubr.bf16.gmra.mrb[0].mxu0 %v343
    %v766 = vpop.f32.mrb[0].mxu0
    %v767 = vadd.f32 0.0, %v766
    %v768 = vpop.f32.mrb[0].mxu0
    %v769 = vpop.f32.mrb[0].mxu0
    %v770 = vadd.f32 0.0, %v769
    %v771 = vpop.f32.mrb[0].mxu0
    %772 = vmatprep.mubr.bf16.mxu0 %v523
    %773 = vmatmul.mubr.bf16.gmra.mrb[0].mxu0 %v345
    %v774 = vpop.f32.mrb[0].mxu0
    %v775 = vadd.f32 0.0, %v774
    %v776 = vpop.f32.mrb[0].mxu0
    %v777 = vpop.f32.mrb[0].mxu0
    %v778 = vadd.f32 0.0, %v777
    %v779 = vpop.f32.mrb[0].mxu0
    %780 = vmatprep.mubr.bf16.mxu0 %v526
    %781 = vmatmul.mubr.bf16.gmra.mrb[0].mxu0 %v347
    %v782 = vpop.f32.mrb[0].mxu0
    %v783 = vadd.f32 0.0, %v782
    %v784 = vpop.f32.mrb[0].mxu0
    %v785 = vpop.f32.mrb[0].mxu0
    %v786 = vadd.f32 0.0, %v785
    %v787 = vpop.f32.mrb[0].mxu0
    %788 = vmatprep.mubr.bf16.mxu0 %v529
    %789 = vmatmul.mubr.bf16.gmra.mrb[0].mxu0 %v349
    %v790 = vpop.f32.mrb[0].mxu0
    %v791 = vadd.f32 0.0, %v790
    %v792 = vpop.f32.mrb[0].mxu0
    %v793 = vpop.f32.mrb[0].mxu0
    %v794 = vadd.f32 0.0, %v793
    %v795 = vpop.f32.mrb[0].mxu0
    %796 = vmatprep.mubr.bf16.mxu0 %v532
    %797 = vmatmul.mubr.bf16.gmra.mrb[0].mxu0 %v351
    %v798 = vpop.f32.mrb[0].mxu0
    %v799 = vadd.f32 0.0, %v798
    %v800 = vpop.f32.mrb[0].mxu0
    %v801 = vpop.f32.mrb[0].mxu0
    %v802 = vadd.f32 0.0, %v801
    %v803 = vpop.f32.mrb[0].mxu0
    %804 = vmatprep.mubr.bf16.mxu0 %v535
    %805 = vmatmul.mubr.bf16.gmra.mrb[0].mxu0 %v353
    %v806 = vpop.f32.mrb[0].mxu0
    %v807 = vadd.f32 0.0, %v806
    %v808 = vpop.f32.mrb[0].mxu0
    %v809 = vpop.f32.mrb[0].mxu0
    %v810 = vadd.f32 0.0, %v809
    %v811 = vpop.f32.mrb[0].mxu0
    %812 = vmatprep.mubr.bf16.mxu0 %v538
    %813 = vmatmul.mubr.bf16.gmra.mrb[0].mxu0 %v355
    %v814 = vpop.f32.mrb[0].mxu0
    %v815 = vadd.f32 0.0, %v814
    %v816 = vpop.f32.mrb[0].mxu0
    %v817 = vpop.f32.mrb[0].mxu0
    %v818 = vadd.f32 0.0, %v817
    %v819 = vpop.f32.mrb[0].mxu0
    %820 = vmatprep.mubr.bf16.mxu0 %v541
    %821 = vmatmul.mubr.bf16.gmra.mrb[0].mxu0 %v357
    %v822 = vpop.f32.mrb[0].mxu0
    %v823 = vadd.f32 0.0, %v822
    %v824 = vpop.f32.mrb[0].mxu0
    %v825 = vpop.f32.mrb[0].mxu0
    %v826 = vadd.f32 0.0, %v825
    %v827 = vpop.f32.mrb[0].mxu0
    %828 = vmatprep.mubr.bf16.mxu0 %v544
    %829 = vmatmul.mubr.bf16.gmra.mrb[0].mxu0 %v359
    %v830 = vpop.f32.mrb[0].mxu0
    %v831 = vadd.f32 0.0, %v830
    %v832 = vpop.f32.mrb[0].mxu0
    %v833 = vpop.f32.mrb[0].mxu0
    %v834 = vadd.f32 0.0, %v833
    %v835 = vpop.f32.mrb[0].mxu0
    %836 = vmatprep.mubr.bf16.mxu0 %v547
    %837 = vmatmul.mubr.bf16.gmra.mrb[0].mxu0 %v361
    %v838 = vpop.f32.mrb[0].mxu0
    %v839 = vadd.f32 0.0, %v838
    %v840 = vpop.f32.mrb[0].mxu0
    %v841 = vpop.f32.mrb[0].mxu0
    %v842 = vadd.f32 0.0, %v841
    %v843 = vpop.f32.mrb[0].mxu0
    %844 = vdwg.mxu0
    %v845 = vpack.c.bf16 %v594, %v591
    %v846 = vpack.c.bf16 %v602, %v599
    %v847 = vpack.c.bf16 %v610, %v607
    %v848 = vpack.c.bf16 %v618, %v615
    %v849 = vpack.c.bf16 %v626, %v623
    %v850 = vpack.c.bf16 %v634, %v631
    %v851 = vpack.c.bf16 %v642, %v639
    %v852 = vpack.c.bf16 %v650, %v647
    %v853 = vpack.c.bf16 %v658, %v655
    %v854 = vpack.c.bf16 %v666, %v663
    %v855 = vpack.c.bf16 %v674, %v671
    %v856 = vpack.c.bf16 %v682, %v679
    %v857 = vpack.c.bf16 %v690, %v687
    %v858 = vpack.c.bf16 %v698, %v695
    %v859 = vpack.c.bf16 %v706, %v703
    %v860 = vpack.c.bf16 %v714, %v711
    %v861 = vpack.c.bf16 %v722, %v719
    %v862 = vpack.c.bf16 %v730, %v727
    %v863 = vpack.c.bf16 %v738, %v735
    %v864 = vpack.c.bf16 %v746, %v743
    %v865 = vpack.c.bf16 %v754, %v751
    %v866 = vpack.c.bf16 %v762, %v759
    %v867 = vpack.c.bf16 %v770, %v767
    %v868 = vpack.c.bf16 %v778, %v775
    %v869 = vpack.c.bf16 %v786, %v783
    %v870 = vpack.c.bf16 %v794, %v791
    %v871 = vpack.c.bf16 %v802, %v799
    %v872 = vpack.c.bf16 %v810, %v807
    %v873 = vpack.c.bf16 %v818, %v815
    %v874 = vpack.c.bf16 %v826, %v823
    %v875 = vpack.c.bf16 %v834, %v831
    %v876 = vpack.c.bf16 %v842, %v839
    %v909 = vunpack.c.l.b16 %v845
    %v910 = vunpack.c.h.b16 %v845
    %v911 = vunpack.c.l.b16 %v846
    %v912 = vunpack.c.h.b16 %v846
    %v913 = vunpack.c.l.b16 %v847
    %v914 = vunpack.c.h.b16 %v847
    %v915 = vunpack.c.l.b16 %v848
    %v916 = vunpack.c.h.b16 %v848
    %v917 = vunpack.c.l.b16 %v849
    %v918 = vunpack.c.h.b16 %v849
    %v919 = vunpack.c.l.b16 %v850
    %v920 = vunpack.c.h.b16 %v850
    %v921 = vunpack.c.l.b16 %v851
    %v922 = vunpack.c.h.b16 %v851
    %v923 = vunpack.c.l.b16 %v852
    %v924 = vunpack.c.h.b16 %v852
    %v925 = vunpack.c.l.b16 %v853
    %v926 = vunpack.c.h.b16 %v853
    %v927 = vunpack.c.l.b16 %v854
    %v928 = vunpack.c.h.b16 %v854
    %v929 = vunpack.c.l.b16 %v855
    %v930 = vunpack.c.h.b16 %v855
    %v931 = vunpack.c.l.b16 %v856
    %v932 = vunpack.c.h.b16 %v856
    %v933 = vunpack.c.l.b16 %v857
    %v934 = vunpack.c.h.b16 %v857
    %v935 = vunpack.c.l.b16 %v858
    %v936 = vunpack.c.h.b16 %v858
    %v937 = vunpack.c.l.b16 %v859
    %v938 = vunpack.c.h.b16 %v859
    %v939 = vunpack.c.l.b16 %v860
    %v940 = vunpack.c.h.b16 %v860
    %v941 = vunpack.c.l.b16 %v861
    %v942 = vunpack.c.h.b16 %v861
    %v943 = vunpack.c.l.b16 %v862
    %v944 = vunpack.c.h.b16 %v862
    %v945 = vunpack.c.l.b16 %v863
    %v946 = vunpack.c.h.b16 %v863
    %v947 = vunpack.c.l.b16 %v864
    %v948 = vunpack.c.h.b16 %v864
    %v949 = vunpack.c.l.b16 %v865
    %v950 = vunpack.c.h.b16 %v865
    %v951 = vunpack.c.l.b16 %v866
    %v952 = vunpack.c.h.b16 %v866
    %v953 = vunpack.c.l.b16 %v867
    %v954 = vunpack.c.h.b16 %v867
    %v955 = vunpack.c.l.b16 %v868
    %v956 = vunpack.c.h.b16 %v868
    %v957 = vunpack.c.l.b16 %v869
    %v958 = vunpack.c.h.b16 %v869
    %v959 = vunpack.c.l.b16 %v870
    %v960 = vunpack.c.h.b16 %v870
    %v961 = vunpack.c.l.b16 %v871
    %v962 = vunpack.c.h.b16 %v871
    %v963 = vunpack.c.l.b16 %v872
    %v964 = vunpack.c.h.b16 %v872
    %v965 = vunpack.c.l.b16 %v873
    %v966 = vunpack.c.h.b16 %v873
    %v967 = vunpack.c.l.b16 %v874
    %v968 = vunpack.c.h.b16 %v874
    %v969 = vunpack.c.l.b16 %v875
    %v970 = vunpack.c.h.b16 %v875
    %v971 = vunpack.c.l.b16 %v876
    %v972 = vunpack.c.h.b16 %v876
    %v973 = vpack.c.b16 %v909, %v909
    %v974 = vpack.c.b16 %v910, %v910
    %v975 = vpack.c.b16 %v911, %v911
    %v976 = vpack.c.b16 %v912, %v912
    %v977 = vpack.c.b16 %v913, %v913
    %v978 = vpack.c.b16 %v914, %v914
    %v979 = vpack.c.b16 %v915, %v915
    %v980 = vpack.c.b16 %v916, %v916
    %v981 = vpack.c.b16 %v917, %v917
    %v982 = vpack.c.b16 %v918, %v918
    %v983 = vpack.c.b16 %v919, %v919
    %v984 = vpack.c.b16 %v920, %v920
    %v985 = vpack.c.b16 %v921, %v921
    %v986 = vpack.c.b16 %v922, %v922
    %v987 = vpack.c.b16 %v923, %v923
    %v988 = vpack.c.b16 %v924, %v924
    %v989 = vpack.c.b16 %v925, %v925
    %v990 = vpack.c.b16 %v926, %v926
    %v991 = vpack.c.b16 %v927, %v927
    %v992 = vpack.c.b16 %v928, %v928
    %v993 = vpack.c.b16 %v929, %v929
    %v994 = vpack.c.b16 %v930, %v930
    %v995 = vpack.c.b16 %v931, %v931
    %v996 = vpack.c.b16 %v932, %v932
    %v997 = vpack.c.b16 %v933, %v933
    %v998 = vpack.c.b16 %v934, %v934
    %v999 = vpack.c.b16 %v935, %v935
    %v1000 = vpack.c.b16 %v936, %v936
    %v1001 = vpack.c.b16 %v937, %v937
    %v1002 = vpack.c.b16 %v938, %v938
    %v1003 = vpack.c.b16 %v939, %v939
    %v1004 = vpack.c.b16 %v940, %v940
    %v1005 = vpack.c.b16 %v941, %v941
    %v1006 = vpack.c.b16 %v942, %v942
    %v1007 = vpack.c.b16 %v943, %v943
    %v1008 = vpack.c.b16 %v944, %v944
    %v1009 = vpack.c.b16 %v945, %v945
    %v1010 = vpack.c.b16 %v946, %v946
    %v1011 = vpack.c.b16 %v947, %v947
    %v1012 = vpack.c.b16 %v948, %v948
    %v1013 = vpack.c.b16 %v949, %v949
    %v1014 = vpack.c.b16 %v950, %v950
    %v1015 = vpack.c.b16 %v951, %v951
    %v1016 = vpack.c.b16 %v952, %v952
    %v1017 = vpack.c.b16 %v953, %v953
    %v1018 = vpack.c.b16 %v954, %v954
    %v1019 = vpack.c.b16 %v955, %v955
    %v1020 = vpack.c.b16 %v956, %v956
    %v1021 = vpack.c.b16 %v957, %v957
    %v1022 = vpack.c.b16 %v958, %v958
    %v1023 = vpack.c.b16 %v959, %v959
    %v1024 = vpack.c.b16 %v960, %v960
    %v1025 = vpack.c.b16 %v961, %v961
    %v1026 = vpack.c.b16 %v962, %v962
    %v1027 = vpack.c.b16 %v963, %v963
    %v1028 = vpack.c.b16 %v964, %v964
    %v1029 = vpack.c.b16 %v965, %v965
    %v1030 = vpack.c.b16 %v966, %v966
    %v1031 = vpack.c.b16 %v967, %v967
    %v1032 = vpack.c.b16 %v968, %v968
    %v1033 = vpack.c.b16 %v969, %v969
    %v1034 = vpack.c.b16 %v970, %v970
    %v1035 = vpack.c.b16 %v971, %v971
    %v1036 = vpack.c.b16 %v972, %v972
    %vm1101 = vcmask 519168
    %1102 = vst.msk [vmem:[%s2] sm:$0xf] %vm1101, %v973
    %1103 = vst.msk [vmem:[%s2 + $0x4] sm:$0xf] %vm1101, %v974
    %1104 = vst.msk [vmem:[%s2 + $0x8] sm:$0xf] %vm1101, %v975
    %1105 = vst.msk [vmem:[%s2 + $0xc] sm:$0xf] %vm1101, %v976
    %1106 = vst.msk [vmem:[%s2 + $0x10] sm:$0xf] %vm1101, %v977
    %1107 = vst.msk [vmem:[%s2 + $0x14] sm:$0xf] %vm1101, %v978
    %1108 = vst.msk [vmem:[%s2 + $0x18] sm:$0xf] %vm1101, %v979
    %1109 = vst.msk [vmem:[%s2 + $0x1c] sm:$0xf] %vm1101, %v980
    %1110 = vst.msk [vmem:[%s2 + $0x20] sm:$0xf] %vm1101, %v981
    %1111 = vst.msk [vmem:[%s2 + $0x24] sm:$0xf] %vm1101, %v982
    %1112 = vst.msk [vmem:[%s2 + $0x28] sm:$0xf] %vm1101, %v983
    %1113 = vst.msk [vmem:[%s2 + $0x2c] sm:$0xf] %vm1101, %v984
    %1114 = vst.msk [vmem:[%s2 + $0x30] sm:$0xf] %vm1101, %v985
    %1115 = vst.msk [vmem:[%s2 + $0x34] sm:$0xf] %vm1101, %v986
    %1116 = vst.msk [vmem:[%s2 + $0x38] sm:$0xf] %vm1101, %v987
    %1117 = vst.msk [vmem:[%s2 + $0x3c] sm:$0xf] %vm1101, %v988
    %1118 = vst.msk [vmem:[%s2 + $0x40] sm:$0xf] %vm1101, %v989
    %1119 = vst.msk [vmem:[%s2 + $0x44] sm:$0xf] %vm1101, %v990
    %1120 = vst.msk [vmem:[%s2 + $0x48] sm:$0xf] %vm1101, %v991
    %1121 = vst.msk [vmem:[%s2 + $0x4c] sm:$0xf] %vm1101, %v992
    %1122 = vst.msk [vmem:[%s2 + $0x50] sm:$0xf] %vm1101, %v993
    %1123 = vst.msk [vmem:[%s2 + $0x54] sm:$0xf] %vm1101, %v994
    %1124 = vst.msk [vmem:[%s2 + $0x58] sm:$0xf] %vm1101, %v995
    %1125 = vst.msk [vmem:[%s2 + $0x5c] sm:$0xf] %vm1101, %v996
    %1126 = vst.msk [vmem:[%s2 + $0x60] sm:$0xf] %vm1101, %v997
    %1127 = vst.msk [vmem:[%s2 + $0x64] sm:$0xf] %vm1101, %v998
    %1128 = vst.msk [vmem:[%s2 + $0x68] sm:$0xf] %vm1101, %v999
    %1129 = vst.msk [vmem:[%s2 + $0x6c] sm:$0xf] %vm1101, %v1000
    %1130 = vst.msk [vmem:[%s2 + $0x70] sm:$0xf] %vm1101, %v1001
    %1131 = vst.msk [vmem:[%s2 + $0x74] sm:$0xf] %vm1101, %v1002
    %1132 = vst.msk [vmem:[%s2 + $0x78] sm:$0xf] %vm1101, %v1003
    %1133 = vst.msk [vmem:[%s2 + $0x7c] sm:$0xf] %vm1101, %v1004
    %1134 = vst.msk [vmem:[%s2 + $0x80] sm:$0xf] %vm1101, %v1005
    %1135 = vst.msk [vmem:[%s2 + $0x84] sm:$0xf] %vm1101, %v1006
    %1136 = vst.msk [vmem:[%s2 + $0x88] sm:$0xf] %vm1101, %v1007
    %1137 = vst.msk [vmem:[%s2 + $0x8c] sm:$0xf] %vm1101, %v1008
    %1138 = vst.msk [vmem:[%s2 + $0x90] sm:$0xf] %vm1101, %v1009
    %1139 = vst.msk [vmem:[%s2 + $0x94] sm:$0xf] %vm1101, %v1010
    %1140 = vst.msk [vmem:[%s2 + $0x98] sm:$0xf] %vm1101, %v1011
    %1141 = vst.msk [vmem:[%s2 + $0x9c] sm:$0xf] %vm1101, %v1012
    %1142 = vst.msk [vmem:[%s2 + $0xa0] sm:$0xf] %vm1101, %v1013
    %1143 = vst.msk [vmem:[%s2 + $0xa4] sm:$0xf] %vm1101, %v1014
    %1144 = vst.msk [vmem:[%s2 + $0xa8] sm:$0xf] %vm1101, %v1015
    %1145 = vst.msk [vmem:[%s2 + $0xac] sm:$0xf] %vm1101, %v1016
    %1146 = vst.msk [vmem:[%s2 + $0xb0] sm:$0xf] %vm1101, %v1017
    %1147 = vst.msk [vmem:[%s2 + $0xb4] sm:$0xf] %vm1101, %v1018
    %1148 = vst.msk [vmem:[%s2 + $0xb8] sm:$0xf] %vm1101, %v1019
    %1149 = vst.msk [vmem:[%s2 + $0xbc] sm:$0xf] %vm1101, %v1020
    %1150 = vst.msk [vmem:[%s2 + $0xc0] sm:$0xf] %vm1101, %v1021
    %1151 = vst.msk [vmem:[%s2 + $0xc4] sm:$0xf] %vm1101, %v1022
    %1152 = vst.msk [vmem:[%s2 + $0xc8] sm:$0xf] %vm1101, %v1023
    %1153 = vst.msk [vmem:[%s2 + $0xcc] sm:$0xf] %vm1101, %v1024
    %1154 = vst.msk [vmem:[%s2 + $0xd0] sm:$0xf] %vm1101, %v1025
    %1155 = vst.msk [vmem:[%s2 + $0xd4] sm:$0xf] %vm1101, %v1026
    %1156 = vst.msk [vmem:[%s2 + $0xd8] sm:$0xf] %vm1101, %v1027
    %1157 = vst.msk [vmem:[%s2 + $0xdc] sm:$0xf] %vm1101, %v1028
    %1158 = vst.msk [vmem:[%s2 + $0xe0] sm:$0xf] %vm1101, %v1029
    %1159 = vst.msk [vmem:[%s2 + $0xe4] sm:$0xf] %vm1101, %v1030
    %1160 = vst.msk [vmem:[%s2 + $0xe8] sm:$0xf] %vm1101, %v1031
    %1161 = vst.msk [vmem:[%s2 + $0xec] sm:$0xf] %vm1101, %v1032
    %1162 = vst.msk [vmem:[%s2 + $0xf0] sm:$0xf] %vm1101, %v1033
    %1163 = vst.msk [vmem:[%s2 + $0xf4] sm:$0xf] %vm1101, %v1034
    %1164 = vst.msk [vmem:[%s2 + $0xf8] sm:$0xf] %vm1101, %v1035
    %1165 = vst.msk [vmem:[%s2 + $0xfc] sm:$0xf] %vm1101, %v1036
    %v1166 = vld [vmem:[#allocation2] sm:$0x1]
    %vm1167 = vcmask 523264
    %v1168 = vsel %vm1167, %v591, 0.0
    %v1169 = vsel %vm1167, %v594, 0.0
    %v1170 = vadd.f32 %v1168, %v1169
    %v1171 = vsel %vm1167, %v599, 0.0
    %v1172 = vadd.f32 %v1170, %v1171
    %v1173 = vsel %vm1167, %v602, 0.0
    %v1174 = vadd.f32 %v1172, %v1173
    %v1175 = vsel %vm1167, %v607, 0.0
    %v1176 = vadd.f32 %v1174, %v1175
    %v1177 = vsel %vm1167, %v610, 0.0
    %v1178 = vadd.f32 %v1176, %v1177
    %v1179 = vsel %vm1167, %v615, 0.0
    %v1180 = vadd.f32 %v1178, %v1179
    %v1181 = vsel %vm1167, %v618, 0.0
    %v1182 = vadd.f32 %v1180, %v1181
    %v1183 = vsel %vm1167, %v623, 0.0
    %v1184 = vadd.f32 %v1182, %v1183
    %v1185 = vsel %vm1167, %v626, 0.0
    %v1186 = vadd.f32 %v1184, %v1185
    %v1187 = vsel %vm1167, %v631, 0.0
    %v1188 = vadd.f32 %v1186, %v1187
    %v1189 = vsel %vm1167, %v634, 0.0
    %v1190 = vadd.f32 %v1188, %v1189
    %v1191 = vsel %vm1167, %v639, 0.0
    %v1192 = vadd.f32 %v1190, %v1191
    %v1193 = vsel %vm1167, %v642, 0.0
    %v1194 = vadd.f32 %v1192, %v1193
    %v1195 = vsel %vm1167, %v647, 0.0
    %v1196 = vadd.f32 %v1194, %v1195
    %v1197 = vsel %vm1167, %v650, 0.0
    %v1198 = vadd.f32 %v1196, %v1197
    %v1199 = vsel %vm1167, %v655, 0.0
    %v1200 = vadd.f32 %v1198, %v1199
    %v1201 = vsel %vm1167, %v658, 0.0
    %v1202 = vadd.f32 %v1200, %v1201
    %v1203 = vsel %vm1167, %v663, 0.0
    %v1204 = vadd.f32 %v1202, %v1203
    %v1205 = vsel %vm1167, %v666, 0.0
    %v1206 = vadd.f32 %v1204, %v1205
    %v1207 = vsel %vm1167, %v671, 0.0
    %v1208 = vadd.f32 %v1206, %v1207
    %v1209 = vsel %vm1167, %v674, 0.0
    %v1210 = vadd.f32 %v1208, %v1209
    %v1211 = vsel %vm1167, %v679, 0.0
    %v1212 = vadd.f32 %v1210, %v1211
    %v1213 = vsel %vm1167, %v682, 0.0
    %v1214 = vadd.f32 %v1212, %v1213
    %v1215 = vsel %vm1167, %v687, 0.0
    %v1216 = vadd.f32 %v1214, %v1215
    %v1217 = vsel %vm1167, %v690, 0.0
    %v1218 = vadd.f32 %v1216, %v1217
    %v1219 = vsel %vm1167, %v695, 0.0
    %v1220 = vadd.f32 %v1218, %v1219
    %v1221 = vsel %vm1167, %v698, 0.0
    %v1222 = vadd.f32 %v1220, %v1221
    %v1223 = vsel %vm1167, %v703, 0.0
    %v1224 = vadd.f32 %v1222, %v1223
    %v1225 = vsel %vm1167, %v706, 0.0
    %v1226 = vadd.f32 %v1224, %v1225
    %v1227 = vsel %vm1167, %v711, 0.0
    %v1228 = vadd.f32 %v1226, %v1227
    %v1229 = vsel %vm1167, %v714, 0.0
    %v1230 = vadd.f32 %v1228, %v1229
    %v1231 = vsel %vm1167, %v719, 0.0
    %v1232 = vadd.f32 %v1230, %v1231
    %v1233 = vsel %vm1167, %v722, 0.0
    %v1234 = vadd.f32 %v1232, %v1233
    %v1235 = vsel %vm1167, %v727, 0.0
    %v1236 = vadd.f32 %v1234, %v1235
    %v1237 = vsel %vm1167, %v730, 0.0
    %v1238 = vadd.f32 %v1236, %v1237
    %v1239 = vsel %vm1167, %v735, 0.0
    %v1240 = vadd.f32 %v1238, %v1239
    %v1241 = vsel %vm1167, %v738, 0.0
    %v1242 = vadd.f32 %v1240, %v1241
    %v1243 = vsel %vm1167, %v743, 0.0
    %v1244 = vadd.f32 %v1242, %v1243
    %v1245 = vsel %vm1167, %v746, 0.0
    %v1246 = vadd.f32 %v1244, %v1245
    %v1247 = vsel %vm1167, %v751, 0.0
    %v1248 = vadd.f32 %v1246, %v1247
    %v1249 = vsel %vm1167, %v754, 0.0
    %v1250 = vadd.f32 %v1248, %v1249
    %v1251 = vsel %vm1167, %v759, 0.0
    %v1252 = vadd.f32 %v1250, %v1251
    %v1253 = vsel %vm1167, %v762, 0.0
    %v1254 = vadd.f32 %v1252, %v1253
    %v1255 = vsel %vm1167, %v767, 0.0
    %v1256 = vadd.f32 %v1254, %v1255
    %v1257 = vsel %vm1167, %v770, 0.0
    %v1258 = vadd.f32 %v1256, %v1257
    %v1259 = vsel %vm1167, %v775, 0.0
    %v1260 = vadd.f32 %v1258, %v1259
    %v1261 = vsel %vm1167, %v778, 0.0
    %v1262 = vadd.f32 %v1260, %v1261
    %v1263 = vsel %vm1167, %v783, 0.0
    %v1264 = vadd.f32 %v1262, %v1263
    %v1265 = vsel %vm1167, %v786, 0.0
    %v1266 = vadd.f32 %v1264, %v1265
    %v1267 = vsel %vm1167, %v791, 0.0
    %v1268 = vadd.f32 %v1266, %v1267
    %v1269 = vsel %vm1167, %v794, 0.0
    %v1270 = vadd.f32 %v1268, %v1269
    %v1271 = vsel %vm1167, %v799, 0.0
    %v1272 = vadd.f32 %v1270, %v1271
    %v1273 = vsel %vm1167, %v802, 0.0
    %v1274 = vadd.f32 %v1272, %v1273
    %v1275 = vsel %vm1167, %v807, 0.0
    %v1276 = vadd.f32 %v1274, %v1275
    %v1277 = vsel %vm1167, %v810, 0.0
    %v1278 = vadd.f32 %v1276, %v1277
    %v1279 = vsel %vm1167, %v815, 0.0
    %v1280 = vadd.f32 %v1278, %v1279
    %v1281 = vsel %vm1167, %v818, 0.0
    %v1282 = vadd.f32 %v1280, %v1281
    %v1283 = vsel %vm1167, %v823, 0.0
    %v1284 = vadd.f32 %v1282, %v1283
    %v1285 = vsel %vm1167, %v826, 0.0
    %v1286 = vadd.f32 %v1284, %v1285
    %v1287 = vsel %vm1167, %v831, 0.0
    %v1288 = vadd.f32 %v1286, %v1287
    %v1289 = vsel %vm1167, %v834, 0.0
    %v1290 = vadd.f32 %v1288, %v1289
    %v1291 = vsel %vm1167, %v839, 0.0
    %v1292 = vadd.f32 %v1290, %v1291
    %v1293 = vsel %vm1167, %v842, 0.0
    %v1294 = vadd.f32 %v1292, %v1293
    %v1295 = vrot.slane %v1294, 4
    %v1296 = vadd.f32 %v1294, %v1295
    %v1297 = vrot.slane %v1296, 2
    %v1298 = vadd.f32 %v1296, %v1297
    %v1299 = vrot.slane %v1298, 1
    %v1300 = vadd.f32 %v1298, %v1299
    %v1301 = vadd.f32 %v1166, %v1300
    %vm1302 = vcmask 516096
    %1303 = vst.msk [vmem:[#allocation2] sm:$0x1] %vm1302, %v1301
    %v1304 = vld [vmem:[#allocation4] sm:$0x1]
    %v1305 = vmul.f32 %v591, %v591
    %v1306 = vmul.f32 %v594, %v594
    %v1307 = vmul.f32 %v599, %v599
    %v1308 = vmul.f32 %v602, %v602
    %v1309 = vmul.f32 %v607, %v607
    %v1310 = vmul.f32 %v610, %v610
    %v1311 = vmul.f32 %v615, %v615
    %v1312 = vmul.f32 %v618, %v618
    %v1313 = vmul.f32 %v623, %v623
    %v1314 = vmul.f32 %v626, %v626
    %v1315 = vmul.f32 %v631, %v631
    %v1316 = vmul.f32 %v634, %v634
    %v1317 = vmul.f32 %v639, %v639
    %v1318 = vmul.f32 %v642, %v642
    %v1319 = vmul.f32 %v647, %v647
    %v1320 = vmul.f32 %v650, %v650
    %v1321 = vmul.f32 %v655, %v655
    %v1322 = vmul.f32 %v658, %v658
    %v1323 = vmul.f32 %v663, %v663
    %v1324 = vmul.f32 %v666, %v666
    %v1325 = vmul.f32 %v671, %v671
    %v1326 = vmul.f32 %v674, %v674
    %v1327 = vmul.f32 %v679, %v679
    %v1328 = vmul.f32 %v682, %v682
    %v1329 = vmul.f32 %v687, %v687
    %v1330 = vmul.f32 %v690, %v690
    %v1331 = vmul.f32 %v695, %v695
    %v1332 = vmul.f32 %v698, %v698
    %v1333 = vmul.f32 %v703, %v703
    %v1334 = vmul.f32 %v706, %v706
    %v1335 = vmul.f32 %v711, %v711
    %v1336 = vmul.f32 %v714, %v714
    %v1337 = vmul.f32 %v719, %v719
    %v1338 = vmul.f32 %v722, %v722
    %v1339 = vmul.f32 %v727, %v727
    %v1340 = vmul.f32 %v730, %v730
    %v1341 = vmul.f32 %v735, %v735
    %v1342 = vmul.f32 %v738, %v738
    %v1343 = vmul.f32 %v743, %v743
    %v1344 = vmul.f32 %v746, %v746
    %v1345 = vmul.f32 %v751, %v751
    %v1346 = vmul.f32 %v754, %v754
    %v1347 = vmul.f32 %v759, %v759
    %v1348 = vmul.f32 %v762, %v762
    %v1349 = vmul.f32 %v767, %v767
    %v1350 = vmul.f32 %v770, %v770
    %v1351 = vmul.f32 %v775, %v775
    %v1352 = vmul.f32 %v778, %v778
    %v1353 = vmul.f32 %v783, %v783
    %v1354 = vmul.f32 %v786, %v786
    %v1355 = vmul.f32 %v791, %v791
    %v1356 = vmul.f32 %v794, %v794
    %v1357 = vmul.f32 %v799, %v799
    %v1358 = vmul.f32 %v802, %v802
    %v1359 = vmul.f32 %v807, %v807
    %v1360 = vmul.f32 %v810, %v810
    %v1361 = vmul.f32 %v815, %v815
    %v1362 = vmul.f32 %v818, %v818
    %v1363 = vmul.f32 %v823, %v823
    %v1364 = vmul.f32 %v826, %v826
    %v1365 = vmul.f32 %v831, %v831
    %v1366 = vmul.f32 %v834, %v834
    %v1367 = vmul.f32 %v839, %v839
    %v1368 = vmul.f32 %v842, %v842
    %v1369 = vsel %vm1167, %v1305, 0.0
    %v1370 = vsel %vm1167, %v1306, 0.0
    %v1371 = vadd.f32 %v1369, %v1370
    %v1372 = vsel %vm1167, %v1307, 0.0
    %v1373 = vadd.f32 %v1371, %v1372
    %v1374 = vsel %vm1167, %v1308, 0.0
    %v1375 = vadd.f32 %v1373, %v1374
    %v1376 = vsel %vm1167, %v1309, 0.0
    %v1377 = vadd.f32 %v1375, %v1376
    %v1378 = vsel %vm1167, %v1310, 0.0
    %v1379 = vadd.f32 %v1377, %v1378
    %v1380 = vsel %vm1167, %v1311, 0.0
    %v1381 = vadd.f32 %v1379, %v1380
    %v1382 = vsel %vm1167, %v1312, 0.0
    %v1383 = vadd.f32 %v1381, %v1382
    %v1384 = vsel %vm1167, %v1313, 0.0
    %v1385 = vadd.f32 %v1383, %v1384
    %v1386 = vsel %vm1167, %v1314, 0.0
    %v1387 = vadd.f32 %v1385, %v1386
    %v1388 = vsel %vm1167, %v1315, 0.0
    %v1389 = vadd.f32 %v1387, %v1388
    %v1390 = vsel %vm1167, %v1316, 0.0
    %v1391 = vadd.f32 %v1389, %v1390
    %v1392 = vsel %vm1167, %v1317, 0.0
    %v1393 = vadd.f32 %v1391, %v1392
    %v1394 = vsel %vm1167, %v1318, 0.0
    %v1395 = vadd.f32 %v1393, %v1394
    %v1396 = vsel %vm1167, %v1319, 0.0
    %v1397 = vadd.f32 %v1395, %v1396
    %v1398 = vsel %vm1167, %v1320, 0.0
    %v1399 = vadd.f32 %v1397, %v1398
    %v1400 = vsel %vm1167, %v1321, 0.0
    %v1401 = vadd.f32 %v1399, %v1400
    %v1402 = vsel %vm1167, %v1322, 0.0
    %v1403 = vadd.f32 %v1401, %v1402
    %v1404 = vsel %vm1167, %v1323, 0.0
    %v1405 = vadd.f32 %v1403, %v1404
    %v1406 = vsel %vm1167, %v1324, 0.0
    %v1407 = vadd.f32 %v1405, %v1406
    %v1408 = vsel %vm1167, %v1325, 0.0
    %v1409 = vadd.f32 %v1407, %v1408
    %v1410 = vsel %vm1167, %v1326, 0.0
    %v1411 = vadd.f32 %v1409, %v1410
    %v1412 = vsel %vm1167, %v1327, 0.0
    %v1413 = vadd.f32 %v1411, %v1412
    %v1414 = vsel %vm1167, %v1328, 0.0
    %v1415 = vadd.f32 %v1413, %v1414
    %v1416 = vsel %vm1167, %v1329, 0.0
    %v1417 = vadd.f32 %v1415, %v1416
    %v1418 = vsel %vm1167, %v1330, 0.0
    %v1419 = vadd.f32 %v1417, %v1418
    %v1420 = vsel %vm1167, %v1331, 0.0
    %v1421 = vadd.f32 %v1419, %v1420
    %v1422 = vsel %vm1167, %v1332, 0.0
    %v1423 = vadd.f32 %v1421, %v1422
    %v1424 = vsel %vm1167, %v1333, 0.0
    %v1425 = vadd.f32 %v1423, %v1424
    %v1426 = vsel %vm1167, %v1334, 0.0
    %v1427 = vadd.f32 %v1425, %v1426
    %v1428 = vsel %vm1167, %v1335, 0.0
    %v1429 = vadd.f32 %v1427, %v1428
    %v1430 = vsel %vm1167, %v1336, 0.0
    %v1431 = vadd.f32 %v1429, %v1430
    %v1432 = vsel %vm1167, %v1337, 0.0
    %v1433 = vadd.f32 %v1431, %v1432
    %v1434 = vsel %vm1167, %v1338, 0.0
    %v1435 = vadd.f32 %v1433, %v1434
    %v1436 = vsel %vm1167, %v1339, 0.0
    %v1437 = vadd.f32 %v1435, %v1436
    %v1438 = vsel %vm1167, %v1340, 0.0
    %v1439 = vadd.f32 %v1437, %v1438
    %v1440 = vsel %vm1167, %v1341, 0.0
    %v1441 = vadd.f32 %v1439, %v1440
    %v1442 = vsel %vm1167, %v1342, 0.0
    %v1443 = vadd.f32 %v1441, %v1442
    %v1444 = vsel %vm1167, %v1343, 0.0
    %v1445 = vadd.f32 %v1443, %v1444
    %v1446 = vsel %vm1167, %v1344, 0.0
    %v1447 = vadd.f32 %v1445, %v1446
    %v1448 = vsel %vm1167, %v1345, 0.0
    %v1449 = vadd.f32 %v1447, %v1448
    %v1450 = vsel %vm1167, %v1346, 0.0
    %v1451 = vadd.f32 %v1449, %v1450
    %v1452 = vsel %vm1167, %v1347, 0.0
    %v1453 = vadd.f32 %v1451, %v1452
    %v1454 = vsel %vm1167, %v1348, 0.0
    %v1455 = vadd.f32 %v1453, %v1454
    %v1456 = vsel %vm1167, %v1349, 0.0
    %v1457 = vadd.f32 %v1455, %v1456
    %v1458 = vsel %vm1167, %v1350, 0.0
    %v1459 = vadd.f32 %v1457, %v1458
    %v1460 = vsel %vm1167, %v1351, 0.0
    %v1461 = vadd.f32 %v1459, %v1460
    %v1462 = vsel %vm1167, %v1352, 0.0
    %v1463 = vadd.f32 %v1461, %v1462
    %v1464 = vsel %vm1167, %v1353, 0.0
    %v1465 = vadd.f32 %v1463, %v1464
    %v1466 = vsel %vm1167, %v1354, 0.0
    %v1467 = vadd.f32 %v1465, %v1466
    %v1468 = vsel %vm1167, %v1355, 0.0
    %v1469 = vadd.f32 %v1467, %v1468
    %v1470 = vsel %vm1167, %v1356, 0.0
    %v1471 = vadd.f32 %v1469, %v1470
    %v1472 = vsel %vm1167, %v1357, 0.0
    %v1473 = vadd.f32 %v1471, %v1472
    %v1474 = vsel %vm1167, %v1358, 0.0
    %v1475 = vadd.f32 %v1473, %v1474
    %v1476 = vsel %vm1167, %v1359, 0.0
    %v1477 = vadd.f32 %v1475, %v1476
    %v1478 = vsel %vm1167, %v1360, 0.0
    %v1479 = vadd.f32 %v1477, %v1478
    %v1480 = vsel %vm1167, %v1361, 0.0
    %v1481 = vadd.f32 %v1479, %v1480
    %v1482 = vsel %vm1167, %v1362, 0.0
    %v1483 = vadd.f32 %v1481, %v1482
    %v1484 = vsel %vm1167, %v1363, 0.0
    %v1485 = vadd.f32 %v1483, %v1484
    %v1486 = vsel %vm1167, %v1364, 0.0
    %v1487 = vadd.f32 %v1485, %v1486
    %v1488 = vsel %vm1167, %v1365, 0.0
    %v1489 = vadd.f32 %v1487, %v1488
    %v1490 = vsel %vm1167, %v1366, 0.0
    %v1491 = vadd.f32 %v1489, %v1490
    %v1492 = vsel %vm1167, %v1367, 0.0
    %v1493 = vadd.f32 %v1491, %v1492
    %v1494 = vsel %vm1167, %v1368, 0.0
    %v1495 = vadd.f32 %v1493, %v1494
    %v1496 = vrot.slane %v1495, 4
    %v1497 = vadd.f32 %v1495, %v1496
    %v1498 = vrot.slane %v1497, 2
    %v1499 = vadd.f32 %v1497, %v1498
    %v1500 = vrot.slane %v1499, 1
    %v1501 = vadd.f32 %v1499, %v1500
    %v1502 = vadd.f32 %v1304, %v1501
    %1503 = vst.msk [vmem:[#allocation4] sm:$0x1] %vm1302, %v1502
    // Predicated region
    $region14: #{tpu_custom_call.1} parent=1 // pred_check
      _
    $region15: #{tpu_custom_call.1} parent=1 // pred_check_branch
      %1505 = sbr.rel (0) target = $region17
    $region16: #{tpu_custom_call.1} parent=1 // pred_region
      _
    $region17: #{tpu_custom_call.1} parent=1 // pred_fallthru
      _
    // Predicated region
    $region18: #{tpu_custom_call.1} parent=1 // pred_check
      _
    $region19: #{tpu_custom_call.1} parent=1 // pred_check_branch
      %1507 = sbr.rel (0) target = $region21
    $region20: #{tpu_custom_call.1} parent=1 // pred_region
      %s1509 = ssub.s32 16, 16
      %1510 = vsyncadd [#allocation3], %s1509
      %s1512 = sshll.u32 [#allocation2], 4
      %s1513 = int_to_ptr.vmem [resolvable:$true] %s1512
      %1515 = dma.vmem_to_hbm [thread:$0]  %s1513, 16, %s3, [#allocation3]
    $region21: #{tpu_custom_call.1} parent=1 // pred_fallthru
      _
    // Predicated region
    $region22: #{tpu_custom_call.1} parent=1 // pred_check
      _
    $region23: #{tpu_custom_call.1} parent=1 // pred_check_branch
      %1517 = sbr.rel (0) target = $region25
    $region24: #{tpu_custom_call.1} parent=1 // pred_region
      %s1519 = ssub.s32 16, 16
      %1520 = vsyncadd [#allocation5], %s1519
      %s1522 = sshll.u32 [#allocation4], 4
      %s1523 = int_to_ptr.vmem [resolvable:$true] %s1522
      %1525 = dma.vmem_to_hbm [thread:$0]  %s1523, 16, %s4, [#allocation5]
    $region25: #{tpu_custom_call.1} parent=1 // pred_fallthru
      _
    // Predicated region
    $region26: #{tpu_custom_call.1} parent=1 // pred_check
      _
    $region27: #{tpu_custom_call.1} parent=1 // pred_check_branch
      %1527 = sbr.rel (0) target = $region29
    $region28: #{tpu_custom_call.1} parent=1 // pred_region
      _
    $region29: #{tpu_custom_call.1} parent=1 // pred_fallthru
      _
    // Predicated region
    $region30: #{tpu_custom_call.1} parent=1 // pred_check
      _
    $region31: #{tpu_custom_call.1} parent=1 // pred_check_branch
      %1529 = sbr.rel (0) target = $region33
    $region32: #{tpu_custom_call.1} parent=1 // pred_region
      %1530 = dma.done [#allocation3], 16
    $region33: #{tpu_custom_call.1} parent=1 // pred_fallthru
      _
    // Predicated region
    $region34: #{tpu_custom_call.1} parent=1 // pred_check
      _
    $region35: #{tpu_custom_call.1} parent=1 // pred_check_branch
      %1532 = sbr.rel (0) target = $region37
    $region36: #{tpu_custom_call.1} parent=1 // pred_region
      %1533 = dma.done [#allocation5], 16
    $region37: #{tpu_custom_call.1} parent=1 // pred_fallthru
      _
    %1534 = vsyncpa [#allocation3], 1
    %1535 = vsyncpa [#allocation5], 1

</llo_original>
